<compile_context>
chip_gen: v7x
topology: tpu7x:2x2x1
jax: 0.10.0
libtpu: 0.0.40
codegen_flags: <defaults>
</compile_context>

<pallas_src>
import jax
import jax.numpy as jnp
from jax.experimental import pallas as pl
from jax.experimental.pallas import tpu as pltpu


def _stack_bounds_kernel(lo_ref, hi_ref, out_ref):
    # lo_ref, hi_ref: [1, tn]    out_ref: [2, tn]
    # Write rows directly (lane-dense stores, no concatenate / relayout).
    out_ref[0:1, :] = lo_ref[...]
    out_ref[1:2, :] = hi_ref[...]


def _stacked_squeezed_shape(elem_shape):
    """Shape of torch.stack([b0, b1], 0).squeeze() given b0.shape."""
    shape = (2,) + tuple(elem_shape)
    return tuple(d for d in shape if d != 1)


def input_hidden_transformer_forward(bounds, assignment=None, *, tn=32768):
    """Pallas implementation of InputHiddenTransformer.forward.

    `bounds` is anything indexable where bounds[0] (lower) and bounds[1]
    (upper) are arrays of identical shape (e.g. a [2, 1, N] array or a pair
    of [1, N] arrays).  Returns (stack([lower, upper], 0).squeeze(), None),
    matching the torch module.  `assignment` is unused by the torch forward
    and is ignored here as well.
    """
    lower = jnp.asarray(bounds[0])
    upper = jnp.asarray(bounds[1])
    assert lower.shape == upper.shape, "lower/upper bounds must match"
    out_dtype = jnp.result_type(lower.dtype, upper.dtype)

    n = int(lower.size)
    assert n > 0, "empty bounds"
    lo2d = lower.reshape(1, n).astype(out_dtype)
    hi2d = upper.reshape(1, n).astype(out_dtype)

    # Lane-dense tiling: last block dim must be a multiple of 128 or the
    # full width.  Pick the largest multiple of 128 (<= tn) dividing n, or a
    # single full-width block for ragged n.  At demo size this collapses to
    # a single block (no per-step grid overhead).
    if n % 128 == 0:
        tn_eff = min(tn, n)
        while n % tn_eff != 0:
            tn_eff -= 128
    else:
        tn_eff = n
    grid = (n // tn_eff,)

    stacked = pl.pallas_call(
        _stack_bounds_kernel,
        out_shape=jax.ShapeDtypeStruct((2, n), out_dtype),
        grid_spec=pltpu.PrefetchScalarGridSpec(
            num_scalar_prefetch=0,
            grid=grid,
            in_specs=[
                pl.BlockSpec((1, tn_eff), lambda j: (0, j)),  # lower
                pl.BlockSpec((1, tn_eff), lambda j: (0, j)),  # upper
            ],
            out_specs=pl.BlockSpec((2, tn_eff), lambda j: (0, j)),
        ),
        compiler_params=pltpu.CompilerParams(
            dimension_semantics=("parallel",)),
    )(lo2d, hi2d)

    out = stacked.reshape(_stacked_squeezed_shape(lower.shape))
    # TODO(synk): the torch module also caches self.bounds on the instance and
    # participates in the DeepPoly back-substitution chain via self.last /
    # self.sub_id; that bookkeeping has no computational content and is not
    # reproduced here (forward already returns params=None as in torch).
    return out, None


if __name__ == "__main__":
    key = jax.random.PRNGKey(0)
    kc, kr = jax.random.split(key, 2)

    N = 1024  # small hidden width for the demo
    center = jax.random.normal(kc, (1, N), dtype=jnp.float32)
    radius = jnp.abs(jax.random.normal(kr, (1, N), dtype=jnp.float32)) * 0.1
    # Laid out like the torch caller: bounds[0]=lower, bounds[1]=upper, each
    # with a leading singleton (batch) dim that .squeeze() removes.
    bounds = jnp.stack([center - radius, center + radius], axis=0)  # [2, 1, N]

    out, params = input_hidden_transformer_forward(bounds)
    out = jax.block_until_ready(out)

    # Pure-JAX reference mirroring the torch forward exactly.
    ref = jnp.squeeze(jnp.stack([bounds[0], bounds[1]], axis=0))

    assert params is None
    assert out.shape == (2, N), out.shape
    assert out.dtype == ref.dtype
    assert bool(jnp.array_equal(out, ref))
    print("KERNEL_OK")
</pallas_src>

<mosaic_0001>
module attributes {stable_mosaic.version = 11 : i64} {
  func.func @_stack_bounds_kernel(%arg0: i32, %arg1: memref<1x1024xf32, #tpu.memory_space<vmem>>, %arg2: memref<1x1024xf32, #tpu.memory_space<vmem>>, %arg3: memref<2x1024xf32, #tpu.memory_space<vmem>>) attributes {dimension_semantics = [#tpu.dimension_semantics<parallel>], iteration_bounds = array<i64: 1>, scalar_prefetch = 0 : i64, scratch_operands = 0 : i64, tpu.core_type = #tpu.core_type<tc>, window_params = [{transform_indices = @transform_0, window_bounds = array<i64: 1, 1024>}, {transform_indices = @transform_1, window_bounds = array<i64: 1, 1024>}, {transform_indices = @transform_2, window_bounds = array<i64: 2, 1024>}]} {
    %c0 = arith.constant 0 : index
    %c0_0 = arith.constant 0 : index
    %0 = vector.load %arg1[%c0, %c0_0] : memref<1x1024xf32, #tpu.memory_space<vmem>>, vector<1x1024xf32>
    %c0_1 = arith.constant 0 : index
    %c0_2 = arith.constant 0 : index
    %1 = vector.load %arg3[%c0_1, %c0_2] : memref<2x1024xf32, #tpu.memory_space<vmem>>, vector<1x1024xf32>
    tpu.vector_store %arg3[%c0_1, %c0_2], %0 {strides = array<i32>} : memref<2x1024xf32, #tpu.memory_space<vmem>>, vector<1x1024xf32>,
    %c0_3 = arith.constant 0 : index
    %c0_4 = arith.constant 0 : index
    %2 = vector.load %arg2[%c0_3, %c0_4] : memref<1x1024xf32, #tpu.memory_space<vmem>>, vector<1x1024xf32>
    %c1 = arith.constant 1 : index
    %c0_5 = arith.constant 0 : index
    %3 = vector.load %arg3[%c1, %c0_5] : memref<2x1024xf32, #tpu.memory_space<vmem>>, vector<1x1024xf32>
    tpu.vector_store %arg3[%c1, %c0_5], %2 {strides = array<i32>} : memref<2x1024xf32, #tpu.memory_space<vmem>>, vector<1x1024xf32>,
    return
  }
  func.func @transform_0(%arg0: i32) -> (i32, i32) {
    %c0_i32 = arith.constant 0 : i32
    %c0_i32_0 = arith.constant 0 : i32
    return %c0_i32, %arg0 : i32, i32
  }
  func.func @transform_1(%arg0: i32) -> (i32, i32) {
    %c0_i32 = arith.constant 0 : i32
    %c0_i32_0 = arith.constant 0 : i32
    return %c0_i32, %arg0 : i32, i32
  }
  func.func @transform_2(%arg0: i32) -> (i32, i32) {
    %c0_i32 = arith.constant 0 : i32
    %c0_i32_0 = arith.constant 0 : i32
    return %c0_i32, %arg0 : i32, i32
  }
}

</mosaic_0001>

<llo_original>
// kernel: tpu_custom_call.1
$region0: #{tpu_custom_call.1}
  #allocation0 [shape = 'u32[]', space=smem, size = 0x4, offset = 0x4, fixed_abs, tag = 'smem constant byte address 0x4 - core index']
  #allocation1 [shape = 'u32[144,128]{1,0:T(1,128)}', space=vmem, size = 0x12000, scoped, tag = 'internal scratch']
  %s0 = inlined_call_operand.hbm [shape: f32[1,1024], index: 0, kind: input, shape index: {}]
  %s1 = inlined_call_operand.hbm [shape: f32[1,1024], index: 1, kind: input, shape index: {}]
  %s2 = inlined_call_operand.hbm [shape: f32[2,1024], index: 2, kind: output, shape index: {}]
  %s3 = sld [smem:[#allocation0]]
  $region26: #{tpu_custom_call.1} parent=0
    _
  %s5 = ssub.s32 1, %s3
  %s6 = scalar_select 0, %s5, %s3
  $region1: #{tpu_custom_call.1} parent=0
    #allocation2 [shape = 'u8[4096]{0}', space=vmem, size = 0x1000, scoped, tag = 'input window, operand 0, single buffered']
    #allocation3 [shape = 's32[1]{0}', space=sflag, size = 0x4, scoped, tag = 'scoped memory for tpu_custom_call.1']
    #allocation4 [shape = 's32[1]{0}', space=sflag, size = 0x4, scoped, tag = 'scoped memory for tpu_custom_call.1']
    #allocation5 [shape = 'u8[4096]{0}', space=vmem, size = 0x1000, scoped, tag = 'input window, operand 1, single buffered']
    #allocation6 [shape = 's32[1]{0}', space=sflag, size = 0x4, scoped, tag = 'scoped memory for tpu_custom_call.1']
    #allocation7 [shape = 'u8[8192]{0}', space=vmem, size = 0x2000, scoped, tag = 'output window, operand 0, single buffered']
    %7 = vsyncpa [#allocation3], 0
    %8 = vsyncpa [#allocation6], 0
    %9 = vsyncpa [#allocation4], 0
    // Predicated region
    $region2: #{tpu_custom_call.1} parent=1 // pred_check
      _
    $region3: #{tpu_custom_call.1} parent=1 // pred_check_branch
      %11 = sbr.rel (0) target = $region5
    $region4: #{tpu_custom_call.1} parent=1 // pred_region
      %s13 = ssub.s32 128, 128
      %14 = vsyncadd [#allocation3], %s13
      %s16 = sshll.u32 [#allocation2], 4
      %s17 = int_to_ptr.vmem [resolvable:$true] %s16
      %19 = dma.hbm_to_vmem [thread:$0]  %s0, 128, %s17, [#allocation3]
    $region5: #{tpu_custom_call.1} parent=1 // pred_fallthru
      _
    // Predicated region
    $region6: #{tpu_custom_call.1} parent=1 // pred_check
      _
    $region7: #{tpu_custom_call.1} parent=1 // pred_check_branch
      %21 = sbr.rel (0) target = $region9
    $region8: #{tpu_custom_call.1} parent=1 // pred_region
      %s23 = ssub.s32 128, 128
      %24 = vsyncadd [#allocation6], %s23
      %s26 = sshll.u32 [#allocation5], 4
      %s27 = int_to_ptr.vmem [resolvable:$true] %s26
      %29 = dma.hbm_to_vmem [thread:$0]  %s1, 128, %s27, [#allocation6]
    $region9: #{tpu_custom_call.1} parent=1 // pred_fallthru
      _
    // Predicated region
    $region10: #{tpu_custom_call.1} parent=1 // pred_check
      _
    $region11: #{tpu_custom_call.1} parent=1 // pred_check_branch
      %31 = sbr.rel (0) target = $region13
    $region12: #{tpu_custom_call.1} parent=1 // pred_region
      %32 = dma.done [#allocation3], 128
    $region13: #{tpu_custom_call.1} parent=1 // pred_fallthru
      _
    // Predicated region
    $region14: #{tpu_custom_call.1} parent=1 // pred_check
      _
    $region15: #{tpu_custom_call.1} parent=1 // pred_check_branch
      %34 = sbr.rel (0) target = $region17
    $region16: #{tpu_custom_call.1} parent=1 // pred_region
      %35 = dma.done [#allocation6], 128
    $region17: #{tpu_custom_call.1} parent=1 // pred_fallthru
      _
    %v36 = vld [vmem:[#allocation2] sm:$0xff]
    %37 = vst [vmem:[#allocation7] ss:$2 sm:$0xff] %v36
    %v38 = vld [vmem:[#allocation5] sm:$0xff]
    %s39 = scalar_lea.vmem [#allocation7], 1
    %40 = vst [vmem:[%s39] ss:$2 sm:$0xff] %v38
    // Predicated region
    $region18: #{tpu_custom_call.1} parent=1 // pred_check
      _
    $region19: #{tpu_custom_call.1} parent=1 // pred_check_branch
      %42 = sbr.rel (0) target = $region21
    $region20: #{tpu_custom_call.1} parent=1 // pred_region
      %s44 = ssub.s32 256, 256
      %45 = vsyncadd [#allocation4], %s44
      %s47 = sshll.u32 [#allocation7], 4
      %s48 = int_to_ptr.vmem [resolvable:$true] %s47
      %50 = dma.vmem_to_hbm [thread:$0]  %s48, 256, %s2, [#allocation4]
    $region21: #{tpu_custom_call.1} parent=1 // pred_fallthru
      _
    // Predicated region
    $region22: #{tpu_custom_call.1} parent=1 // pred_check
      _
    $region23: #{tpu_custom_call.1} parent=1 // pred_check_branch
      %52 = sbr.rel (0) target = $region25
    $region24: #{tpu_custom_call.1} parent=1 // pred_region
      %53 = dma.done [#allocation4], 256
    $region25: #{tpu_custom_call.1} parent=1 // pred_fallthru
      _
    %54 = vsyncpa [#allocation3], 1
    %55 = vsyncpa [#allocation6], 1
    %56 = vsyncpa [#allocation4], 1

</llo_original>
